<compile_context>
chip_gen: v7x
topology: tpu7x:2x2x1
jax: 0.10.0
libtpu: 0.0.40
codegen_flags: <defaults>
</compile_context>

<pallas_src>
import math

import jax
import jax.numpy as jnp
from jax.experimental import pallas as pl
from jax.experimental.pallas import tpu as pltpu


# ---------------------------------------------------------------------------
# Module init (mirrors register_buffer in the PyTorch module)
# ---------------------------------------------------------------------------

def _make_pe(d_model: int, max_len: int) -> jnp.ndarray:
    """Sinusoidal positional-encoding table, shape [max_len, d_model] (f32)."""
    position = jnp.arange(max_len, dtype=jnp.float32)[:, None]            # [max_len, 1]
    div_term = jnp.exp(
        jnp.arange(0, d_model, 2, dtype=jnp.float32)
        * (-math.log(10000.0) / d_model)
    )                                                                      # [ceil(d/2)]
    angles = position * div_term                                           # [max_len, ceil(d/2)]
    n_cos = d_model // 2                                                   # odd d_model safe
    pe = jnp.zeros((max_len, d_model), dtype=jnp.float32)
    pe = pe.at[:, 0::2].set(jnp.sin(angles))
    pe = pe.at[:, 1::2].set(jnp.cos(angles[:, :n_cos]))
    return pe


def _lane_fold(d_model: int) -> int:
    """Smallest f with (d_model * f) % 128 == 0 (lane-dense, unmasked stores)."""
    return 128 // math.gcd(d_model, 128)


def init_positional_encoding(d_model: int, max_len: int = 5000, dtype=jnp.float32):
    """Build pe once: pre-folded to a lane-dense [max_len_f, d_model*fold] buffer
    in the activation dtype, so forward() does no table prep on the hot path."""
    fold = _lane_fold(d_model)
    max_len_pad = pl.cdiv(max_len, fold) * fold
    pe = _make_pe(d_model, max_len)
    if max_len_pad != max_len:
        pe = jnp.pad(pe, ((0, max_len_pad - max_len), (0, 0)))
    pe_folded = pe.astype(dtype).reshape(max_len_pad // fold, d_model * fold)
    return {"pe_folded": pe_folded, "d_model": d_model, "max_len": max_len, "fold": fold}


# ---------------------------------------------------------------------------
# Kernel + forward
# ---------------------------------------------------------------------------

def _pe_add_kernel(x_ref, pe_ref, o_ref):
    # x_ref / o_ref: (tile_b, tile_s, D_f); pe_ref: (tile_s, D_f).
    # Single VPU add per vreg; broadcast along the leading (batch) block dim.
    o_ref[...] = (x_ref[...] + pe_ref[...][None, :, :]).astype(o_ref.dtype)


def _device_tuning():
    """(target block bytes, vmem_limit_bytes) per TPU generation."""
    try:
        kind = jax.devices()[0].device_kind.lower()
    except Exception:
        kind = ""
    if "v5 lite" in kind or "v5e" in kind or "v5lite" in kind:
        # 820 GB/s HBM: 2 MiB blocks already amortize the ~0.35us/step overhead.
        return 2 * 1024 * 1024, 32 * 1024 * 1024
    if "v6" in kind:
        # 128 MiB physical VMEM, ~1.4 TB/s HBM: bigger blocks are free wins.
        return 8 * 1024 * 1024, 64 * 1024 * 1024
    if "7x" in kind or "tpu7" in kind or "v7" in kind:
        # 64 MiB physical VMEM, 3.2 TB/s HBM: big blocks, but leave headroom.
        return 6 * 1024 * 1024, 48 * 1024 * 1024
    return 4 * 1024 * 1024, 32 * 1024 * 1024


def _choose_tiles(B, S_f, D_f, dtype_bytes, target_bytes):
    """Pick (tile_b, tile_s). Blocks ~target_bytes; tile_s is a dtype-aware
    sublane multiple or the full extent; batch folded in when seq is small."""
    row_bytes = D_f * dtype_bytes
    per_seq_bytes = S_f * row_bytes
    pack = 8 * max(1, 4 // dtype_bytes)   # rows per vreg: f32=8, bf16=16, i8/fp8=32
    if per_seq_bytes >= target_bytes:
        rows = max(pack, (target_bytes // row_bytes) // pack * pack)
        tile_s = int(min(rows, S_f))
        tile_b = 1
    else:
        tile_s = S_f
        tile_b = int(min(B, max(1, target_bytes // per_seq_bytes)))
    return tile_b, tile_s


def positional_encoding_forward(x: jnp.ndarray, pe_state: dict, *,
                                donate_x: bool = False) -> jnp.ndarray:
    """x: [B, S, D]. Returns x + pe[:S] (same dtype/shape as x)."""
    B, S, D = x.shape
    if D != pe_state["d_model"]:
        raise ValueError(f"d_model mismatch: {D} vs {pe_state['d_model']}")
    if S > pe_state["max_len"]:
        raise ValueError(f"sequence length {S} exceeds max_len {pe_state['max_len']}")

    fold = pe_state["fold"]
    pe_folded = pe_state["pe_folded"]
    if pe_folded.dtype != x.dtype:
        # Off-design path; prefer init_positional_encoding(..., dtype=x.dtype).
        pe_folded = pe_folded.astype(x.dtype)

    # Lane-dense layout: pad S to a multiple of the fold factor (no silent
    # fall-back to masked stores), then fold rows into the lane axis.
    S_pad = pl.cdiv(S, fold) * fold
    x_in = x if S_pad == S else jnp.pad(x, ((0, 0), (0, S_pad - S), (0, 0)))
    S_f = S_pad // fold
    D_f = D * fold
    x_f = x_in.reshape(B, S_f, D_f)

    dtype_bytes = jnp.dtype(x.dtype).itemsize
    target_bytes, vmem_limit = _device_tuning()
    tile_b, tile_s = _choose_tiles(B, S_f, D_f, dtype_bytes, target_bytes)

    # pe block's sublane dim must be a multiple of 8 or the array's full first
    # dim. tile_s < S_f is always a pack multiple; only the single-seq-tile case
    # (tile_s == S_f, possibly not a multiple of 8) needs the tiny slice.
    pe_in = pe_folded if tile_s % 8 == 0 else pe_folded[:S_f]

    # Batch innermost: pe's block index depends only on the outer (seq) axis, so
    # the pipeliner keeps the pe tile resident across the whole batch loop and
    # DMAs it from HBM once per seq tile instead of once per batch element.
    grid = (pl.cdiv(S_f, tile_s), pl.cdiv(B, tile_b))

    alias_kwargs = {"input_output_aliases": {0: 0}} if donate_x else {}

    out = pl.pallas_call(
        _pe_add_kernel,
        out_shape=jax.ShapeDtypeStruct((B, S_f, D_f), x.dtype),
        grid_spec=pltpu.PrefetchScalarGridSpec(
            num_scalar_prefetch=0,
            grid=grid,
            in_specs=[
                # x: per (seq-tile, batch-tile) block.
                pl.BlockSpec((tile_b, tile_s, D_f), lambda s, b: (b, s, 0)),
                # pe: shared across batch; index only advances with the seq tile.
                pl.BlockSpec((tile_s, D_f), lambda s, b: (s, 0)),
            ],
            out_specs=pl.BlockSpec((tile_b, tile_s, D_f), lambda s, b: (b, s, 0)),
        ),
        compiler_params=pltpu.CompilerParams(
            dimension_semantics=("parallel", "parallel"),
            vmem_limit_bytes=vmem_limit,
        ),
        **alias_kwargs,
    )(x_f, pe_in)

    out = out.reshape(B, S_pad, D)
    return out if S_pad == S else out[:, :S, :]


if __name__ == "__main__":
    d_model = 32
    max_len = 64
    B, S = 2, 8

    key = jax.random.PRNGKey(0)
    x = jax.random.normal(key, (B, S, d_model), dtype=jnp.float32)

    # Module "init": folded pe buffer in the activation dtype (f32 here, so it
    # matches the PyTorch fp32-buffer semantics exactly).
    pe_state = init_positional_encoding(d_model, max_len=max_len, dtype=x.dtype)

    # Pure-JAX reference against the unfolded fp32 table (PyTorch semantics).
    ref = x + _make_pe(d_model, max_len)[None, :S, :]

    out = positional_encoding_forward(x, pe_state)
    out = jax.block_until_ready(out)

    assert out.shape == x.shape
    assert jnp.allclose(out, ref, atol=1e-6), "mismatch vs reference"

    print("KERNEL_OK")
</pallas_src>

<mosaic_0001>
module attributes {stable_mosaic.version = 11 : i64} {
  func.func @_pe_add_kernel(%arg0: i32, %arg1: i32, %arg2: memref<2x2x128xf32, #tpu.memory_space<vmem>>, %arg3: memref<2x128xf32, #tpu.memory_space<vmem>>, %arg4: memref<2x2x128xf32, #tpu.memory_space<vmem>>) attributes {dimension_semantics = [#tpu.dimension_semantics<parallel>, #tpu.dimension_semantics<parallel>], iteration_bounds = array<i64: 1, 1>, scalar_prefetch = 0 : i64, scratch_operands = 0 : i64, tpu.core_type = #tpu.core_type<tc>, window_params = [{transform_indices = @transform_0, window_bounds = array<i64: 2, 2, 128>}, {transform_indices = @transform_1, window_bounds = array<i64: 2, 128>}, {transform_indices = @transform_2, window_bounds = array<i64: 2, 2, 128>}]} {
    %c0 = arith.constant 0 : index
    %c0_0 = arith.constant 0 : index
    %c0_1 = arith.constant 0 : index
    %0 = vector.load %arg2[%c0, %c0_0, %c0_1] : memref<2x2x128xf32, #tpu.memory_space<vmem>>, vector<2x2x128xf32>
    %c0_2 = arith.constant 0 : index
    %c0_3 = arith.constant 0 : index
    %1 = vector.load %arg3[%c0_2, %c0_3] : memref<2x128xf32, #tpu.memory_space<vmem>>, vector<2x128xf32>
    %2 = vector.shape_cast %1 : vector<2x128xf32> to vector<1x2x128xf32>
    %3 = vector.broadcast %2 : vector<1x2x128xf32> to vector<2x2x128xf32>
    %4 = arith.addf %0, %3 : vector<2x2x128xf32>
    %c0_4 = arith.constant 0 : index
    %c0_5 = arith.constant 0 : index
    %c0_6 = arith.constant 0 : index
    %5 = vector.load %arg4[%c0_4, %c0_5, %c0_6] : memref<2x2x128xf32, #tpu.memory_space<vmem>>, vector<2x2x128xf32>
    tpu.vector_store %arg4[%c0_4, %c0_5, %c0_6], %4 {strides = array<i32>} : memref<2x2x128xf32, #tpu.memory_space<vmem>>, vector<2x2x128xf32>,
    return
  }
  func.func @transform_0(%arg0: i32, %arg1: i32) -> (i32, i32, i32) {
    %c0_i32 = arith.constant 0 : i32
    %c0_i32_0 = arith.constant 0 : i32
    return %arg1, %arg0, %c0_i32 : i32, i32, i32
  }
  func.func @transform_1(%arg0: i32, %arg1: i32) -> (i32, i32) {
    %c0_i32 = arith.constant 0 : i32
    %c0_i32_0 = arith.constant 0 : i32
    return %arg0, %c0_i32 : i32, i32
  }
  func.func @transform_2(%arg0: i32, %arg1: i32) -> (i32, i32, i32) {
    %c0_i32 = arith.constant 0 : i32
    %c0_i32_0 = arith.constant 0 : i32
    return %arg1, %arg0, %c0_i32 : i32, i32, i32
  }
}

</mosaic_0001>

<llo_original>
// kernel: tpu_custom_call.1
$region0: #{tpu_custom_call.1}
  #allocation0 [shape = 'u32[]', space=smem, size = 0x4, offset = 0x4, fixed_abs, tag = 'smem constant byte address 0x4 - core index']
  #allocation1 [shape = 'u32[144,128]{1,0:T(1,128)}', space=vmem, size = 0x12000, scoped, tag = 'internal scratch']
  %s0 = inlined_call_operand.hbm [shape: f32[2,2,128], index: 0, kind: input, shape index: {}]
  %s1 = inlined_call_operand.vmem [shape: f32[2,128], index: 1, kind: input, shape index: {}]
  %s2 = inlined_call_operand.hbm [shape: f32[2,2,128], index: 2, kind: output, shape index: {}]
  %s3 = sld [smem:[#allocation0]]
  $region22: #{tpu_custom_call.1} parent=0
    _
  %s5 = ssub.s32 1, %s3
  %s6 = scalar_select 0, %s5, %s3
  $region1: #{tpu_custom_call.1} parent=0
    #allocation2 [shape = 'u8[2048]{0}', space=vmem, size = 0x800, scoped, tag = 'input window, operand 0, single buffered']
    #allocation3 [shape = 's32[1]{0}', space=sflag, size = 0x4, scoped, tag = 'scoped memory for tpu_custom_call.1']
    #allocation4 [shape = 's32[1]{0}', space=sflag, size = 0x4, scoped, tag = 'scoped memory for tpu_custom_call.1']
    #allocation5 [shape = 'u8[2048]{0}', space=vmem, size = 0x800, scoped, tag = 'output window, operand 0, single buffered']
    %7 = vsyncpa [#allocation3], 0
    %8 = vsyncpa [#allocation4], 0
    // Predicated region
    $region2: #{tpu_custom_call.1} parent=1 // pred_check
      _
    $region3: #{tpu_custom_call.1} parent=1 // pred_check_branch
      %10 = sbr.rel (0) target = $region5
    $region4: #{tpu_custom_call.1} parent=1 // pred_region
      %s12 = ssub.s32 64, 64
      %13 = vsyncadd [#allocation3], %s12
      %s14 = sshll.u32 [#allocation2], 4
      %s15 = int_to_ptr.vmem [resolvable:$true] %s14
      %20 = dma.hbm_to_vmem [thread:$0]  %s0, 64, %s15, [#allocation3], 32, 32, 2
    $region5: #{tpu_custom_call.1} parent=1 // pred_fallthru
      _
    // Predicated region
    $region6: #{tpu_custom_call.1} parent=1 // pred_check
      _
    $region7: #{tpu_custom_call.1} parent=1 // pred_check_branch
      %22 = sbr.rel (0) target = $region9
    $region8: #{tpu_custom_call.1} parent=1 // pred_region
      _
    $region9: #{tpu_custom_call.1} parent=1 // pred_fallthru
      _
    // Predicated region
    $region10: #{tpu_custom_call.1} parent=1 // pred_check
      _
    $region11: #{tpu_custom_call.1} parent=1 // pred_check_branch
      %24 = sbr.rel (0) target = $region13
    $region12: #{tpu_custom_call.1} parent=1 // pred_region
      %25 = dma.done [#allocation3], 64
    $region13: #{tpu_custom_call.1} parent=1 // pred_fallthru
      _
    %v26 = vld [vmem:[#allocation2] sm:$0x3]
    %v27 = vld [vmem:[#allocation2 + $0x2] sm:$0x3]
    %v28 = vld [vmem:[%s1] sm:$0x3]
    %v29 = vadd.f32 %v26, %v28
    %v30 = vadd.f32 %v27, %v28
    %31 = vst [vmem:[#allocation5] sm:$0x3] %v29
    %32 = vst [vmem:[#allocation5 + $0x2] sm:$0x3] %v30
    // Predicated region
    $region14: #{tpu_custom_call.1} parent=1 // pred_check
      _
    $region15: #{tpu_custom_call.1} parent=1 // pred_check_branch
      %34 = sbr.rel (0) target = $region17
    $region16: #{tpu_custom_call.1} parent=1 // pred_region
      %s36 = ssub.s32 64, 64
      %37 = vsyncadd [#allocation4], %s36
      %s38 = sshll.u32 [#allocation5], 4
      %s39 = int_to_ptr.vmem [resolvable:$true] %s38
      %44 = dma.vmem_to_hbm [thread:$0]  %s39, 64, %s2, [#allocation4], 32, 32, 2
    $region17: #{tpu_custom_call.1} parent=1 // pred_fallthru
      _
    // Predicated region
    $region18: #{tpu_custom_call.1} parent=1 // pred_check
      _
    $region19: #{tpu_custom_call.1} parent=1 // pred_check_branch
      %46 = sbr.rel (0) target = $region21
    $region20: #{tpu_custom_call.1} parent=1 // pred_region
      %47 = dma.done [#allocation4], 64
    $region21: #{tpu_custom_call.1} parent=1 // pred_fallthru
      _
    %48 = vsyncpa [#allocation3], 1
    %49 = vsyncpa [#allocation4], 1

</llo_original>
